<compile_context>
chip_gen: v7x
topology: tpu7x:2x2x1
jax: 0.10.0
libtpu: 0.0.40
codegen_flags: <defaults>
</compile_context>

<pallas_src>
import functools

import jax
import jax.numpy as jnp
from jax.experimental import pallas as pl
from jax.experimental.pallas import tpu as pltpu


def _fermi_dirac_kernel(dist_ref, o_ref, *, r, inv_t):
    # Elementwise: probs = 1 / (exp((dist - r) / t) + 1)
    # Compute in f32 (safe on v5e which has no bf16 VPU/EUP), cast back on store.
    x = dist_ref[...].astype(jnp.float32)
    z = (x - r) * inv_t
    # Exact division keeps full f32 accuracy; the op is HBM-bound so the EUP
    # divide is hidden anyway.  (pl.reciprocal(..., approx=True) would also work.)
    probs = 1.0 / (jnp.exp(z) + 1.0)
    o_ref[...] = probs.astype(o_ref.dtype)


def fermi_dirac_decoder(dist, *, r=5.0, t=1.0, block_rows=256, lane_width=512):
    """probs = 1 / (exp((dist - r) / t) + 1), elementwise, any input shape."""
    orig_shape = dist.shape
    orig_dtype = dist.dtype
    n = dist.size
    itemsize = jnp.dtype(orig_dtype).itemsize

    # Lay the flattened input out as a lane-dense (rows, lane_width) slab.
    assert lane_width % 128 == 0
    rows = pl.cdiv(n, lane_width)
    # Keep the row tile a multiple of 8 (sublane) but don't over-pad tiny inputs.
    rows_aligned = pl.cdiv(rows, 8) * 8
    tm = min(block_rows, rows_aligned)
    rows_padded = pl.cdiv(rows, tm) * tm
    total = rows_padded * lane_width

    flat = jnp.ravel(dist)
    pad = total - n
    if pad:
        flat = jnp.pad(flat, (0, pad))  # padded tail is harmless for exp()
    x2d = flat.reshape(rows_padded, lane_width)

    kernel = functools.partial(_fermi_dirac_kernel, r=float(r), inv_t=1.0 / float(t))

    out2d = pl.pallas_call(
        kernel,
        out_shape=jax.ShapeDtypeStruct((rows_padded, lane_width), orig_dtype),
        grid_spec=pltpu.PrefetchScalarGridSpec(
            num_scalar_prefetch=0,
            grid=(rows_padded // tm,),
            in_specs=[pl.BlockSpec((tm, lane_width), lambda i: (i, 0))],
            out_specs=pl.BlockSpec((tm, lane_width), lambda i: (i, 0)),
        ),
        compiler_params=pltpu.CompilerParams(
            dimension_semantics=("parallel",),
            vmem_limit_bytes=64 << 20,
        ),
        cost_estimate=pl.CostEstimate(
            flops=4 * total,
            transcendentals=total,
            bytes_accessed=2 * total * itemsize,
        ),
    )(x2d)

    return out2d.reshape(-1)[:n].reshape(orig_shape)


if __name__ == "__main__":
    # Small shapes consistent with the module: dist is a batch of pairwise/edge
    # distances, e.g. [batch=2, seq=8, nodes=128].
    t = 1.0  # module hyper-parameter
    r = 5.0  # fixed in the module

    key = jax.random.PRNGKey(0)
    dist = jax.random.uniform(key, (2, 8, 128), dtype=jnp.float32,
                              minval=0.0, maxval=10.0)

    out = fermi_dirac_decoder(dist, r=r, t=t)
    out = jax.block_until_ready(out)

    # Reference (same semantics as the PyTorch forward).
    ref = 1.0 / (jnp.exp((dist - r) / t) + 1.0)

    assert out.shape == dist.shape
    assert jnp.allclose(out, ref, atol=1e-5, rtol=1e-5)

    print("KERNEL_OK")
</pallas_src>

<mosaic_0001>
module attributes {stable_mosaic.version = 11 : i64} {
  func.func @_fermi_dirac_kernel(%arg0: i32, %arg1: memref<8x512xf32, #tpu.memory_space<vmem>>, %arg2: memref<8x512xf32, #tpu.memory_space<vmem>>) attributes {dimension_semantics = [#tpu.dimension_semantics<parallel>], iteration_bounds = array<i64: 1>, scalar_prefetch = 0 : i64, scratch_operands = 0 : i64, tpu.core_type = #tpu.core_type<tc>, window_params = [{transform_indices = @transform_0, window_bounds = array<i64: 8, 512>}, {transform_indices = @transform_1, window_bounds = array<i64: 8, 512>}]} {
    %c0 = arith.constant 0 : index
    %c0_0 = arith.constant 0 : index
    %0 = vector.load %arg1[%c0, %c0_0] : memref<8x512xf32, #tpu.memory_space<vmem>>, vector<8x512xf32>
    %cst = arith.constant 5.000000e+00 : f32
    %1 = vector.broadcast %cst : f32 to vector<8x512xf32>
    %2 = arith.subf %0, %1 : vector<8x512xf32>
    %cst_1 = arith.constant 1.000000e+00 : f32
    %3 = vector.broadcast %cst_1 : f32 to vector<8x512xf32>
    %4 = arith.mulf %2, %3 : vector<8x512xf32>
    %5 = math.exp %4 : vector<8x512xf32>
    %cst_2 = arith.constant 1.000000e+00 : f32
    %6 = vector.broadcast %cst_2 : f32 to vector<8x512xf32>
    %7 = arith.addf %5, %6 : vector<8x512xf32>
    %cst_3 = arith.constant 1.000000e+00 : f32
    %8 = vector.broadcast %cst_3 : f32 to vector<8x512xf32>
    %9 = arith.divf %8, %7 : vector<8x512xf32>
    %c0_4 = arith.constant 0 : index
    %c0_5 = arith.constant 0 : index
    %10 = vector.load %arg2[%c0_4, %c0_5] : memref<8x512xf32, #tpu.memory_space<vmem>>, vector<8x512xf32>
    tpu.vector_store %arg2[%c0_4, %c0_5], %9 {strides = array<i32>} : memref<8x512xf32, #tpu.memory_space<vmem>>, vector<8x512xf32>,
    return
  }
  func.func @transform_0(%arg0: i32) -> (i32, i32) {
    %c0_i32 = arith.constant 0 : i32
    %c0_i32_0 = arith.constant 0 : i32
    return %arg0, %c0_i32 : i32, i32
  }
  func.func @transform_1(%arg0: i32) -> (i32, i32) {
    %c0_i32 = arith.constant 0 : i32
    %c0_i32_0 = arith.constant 0 : i32
    return %arg0, %c0_i32 : i32, i32
  }
}

</mosaic_0001>

<llo_original>
// kernel: tpu_custom_call.1
$region0: #{tpu_custom_call.1}
  #allocation0 [shape = 'u32[]', space=smem, size = 0x4, offset = 0x4, fixed_abs, tag = 'smem constant byte address 0x4 - core index']
  #allocation1 [shape = 'u32[144,128]{1,0:T(1,128)}', space=vmem, size = 0x12000, scoped, tag = 'internal scratch']
  %s0 = inlined_call_operand.hbm [shape: f32[8,512], index: 0, kind: input, shape index: {}]
  %s1 = inlined_call_operand.hbm [shape: f32[8,512], index: 1, kind: output, shape index: {}]
  %s2 = sld [smem:[#allocation0]]
  $region18: #{tpu_custom_call.1} parent=0
    _
  %s4 = ssub.s32 1, %s2
  %s5 = scalar_select 0, %s4, %s2
  $region1: #{tpu_custom_call.1} parent=0
    #allocation2 [shape = 'u8[16384]{0}', space=vmem, size = 0x4000, scoped, tag = 'input window, operand 0, single buffered']
    #allocation3 [shape = 's32[1]{0}', space=sflag, size = 0x4, scoped, tag = 'scoped memory for tpu_custom_call.1']
    #allocation4 [shape = 's32[1]{0}', space=sflag, size = 0x4, scoped, tag = 'scoped memory for tpu_custom_call.1']
    #allocation5 [shape = 'u8[16384]{0}', space=vmem, size = 0x4000, scoped, tag = 'output window, operand 0, single buffered']
    %6 = vsyncpa [#allocation3], 0
    %7 = vsyncpa [#allocation4], 0
    // Predicated region
    $region2: #{tpu_custom_call.1} parent=1 // pred_check
      _
    $region3: #{tpu_custom_call.1} parent=1 // pred_check_branch
      %9 = sbr.rel (0) target = $region5
    $region4: #{tpu_custom_call.1} parent=1 // pred_region
      %s11 = ssub.s32 512, 512
      %12 = vsyncadd [#allocation3], %s11
      %s14 = sshll.u32 [#allocation2], 4
      %s15 = int_to_ptr.vmem [resolvable:$true] %s14
      %17 = dma.hbm_to_vmem [thread:$0]  %s0, 512, %s15, [#allocation3]
    $region5: #{tpu_custom_call.1} parent=1 // pred_fallthru
      _
    // Predicated region
    $region6: #{tpu_custom_call.1} parent=1 // pred_check
      _
    $region7: #{tpu_custom_call.1} parent=1 // pred_check_branch
      %19 = sbr.rel (0) target = $region9
    $region8: #{tpu_custom_call.1} parent=1 // pred_region
      %20 = dma.done [#allocation3], 512
    $region9: #{tpu_custom_call.1} parent=1 // pred_fallthru
      _
    %v21 = vld [vmem:[#allocation2] sm:$0xff]
    %v22 = vld [vmem:[#allocation2 + $0x8] sm:$0xff]
    %v23 = vld [vmem:[#allocation2 + $0x10] sm:$0xff]
    %v24 = vld [vmem:[#allocation2 + $0x18] sm:$0xff]
    %v25 = vsub.f32 %v21, 5.0
    %v26 = vsub.f32 %v22, 5.0
    %v27 = vsub.f32 %v23, 5.0
    %v28 = vsub.f32 %v24, 5.0
    %v29 = vmul.f32 %v25, 1.442695
    %v30 = vpow.pop %v29
    %v31 = vmul.f32 %v26, 1.442695
    %v32 = vpow.pop %v31
    %v33 = vmul.f32 %v27, 1.442695
    %v34 = vpow.pop %v33
    %v35 = vmul.f32 %v28, 1.442695
    %v36 = vpow.pop %v35
    %v37 = vadd.f32 %v30, 1.0
    %v38 = vadd.f32 %v32, 1.0
    %v39 = vadd.f32 %v34, 1.0
    %v40 = vadd.f32 %v36, 1.0
    %v41 = vrcp.pop %v37
    %v42 = vmul.f32 1.0, %v41
    %v43 = vrcp.pop %v38
    %v44 = vmul.f32 1.0, %v43
    %v45 = vrcp.pop %v39
    %v46 = vmul.f32 1.0, %v45
    %v47 = vrcp.pop %v40
    %v48 = vmul.f32 1.0, %v47
    %49 = vst [vmem:[#allocation5] sm:$0xff] %v42
    %50 = vst [vmem:[#allocation5 + $0x8] sm:$0xff] %v44
    %51 = vst [vmem:[#allocation5 + $0x10] sm:$0xff] %v46
    %52 = vst [vmem:[#allocation5 + $0x18] sm:$0xff] %v48
    // Predicated region
    $region10: #{tpu_custom_call.1} parent=1 // pred_check
      _
    $region11: #{tpu_custom_call.1} parent=1 // pred_check_branch
      %54 = sbr.rel (0) target = $region13
    $region12: #{tpu_custom_call.1} parent=1 // pred_region
      %s56 = ssub.s32 512, 512
      %57 = vsyncadd [#allocation4], %s56
      %s59 = sshll.u32 [#allocation5], 4
      %s60 = int_to_ptr.vmem [resolvable:$true] %s59
      %62 = dma.vmem_to_hbm [thread:$0]  %s60, 512, %s1, [#allocation4]
    $region13: #{tpu_custom_call.1} parent=1 // pred_fallthru
      _
    // Predicated region
    $region14: #{tpu_custom_call.1} parent=1 // pred_check
      _
    $region15: #{tpu_custom_call.1} parent=1 // pred_check_branch
      %64 = sbr.rel (0) target = $region17
    $region16: #{tpu_custom_call.1} parent=1 // pred_region
      %65 = dma.done [#allocation4], 512
    $region17: #{tpu_custom_call.1} parent=1 // pred_fallthru
      _
    %66 = vsyncpa [#allocation3], 1
    %67 = vsyncpa [#allocation4], 1

</llo_original>
